<compile_context>
chip_gen: v6e
topology: v6e:2x2x1
jax: 0.10.0
libtpu: 0.0.40
codegen_flags: <defaults>
</compile_context>

<pallas_src>
import jax
import jax.numpy as jnp
from jax.experimental import pallas as pl
from jax.experimental.pallas import tpu as pltpu


# ---------------------------------------------------------------------------
# Fused kernel (grid over parameter chunks)
# ---------------------------------------------------------------------------

def _make_fused_kernel(chunk_rows, slide_batch, move_batch, value_n, numel,
                       weight_regularization):
    """Kernel computing
        -sum(st*log_softmax(sp))/B_s - sum(mt*log_softmax(mp))/B_m
        + mean((vp-vt)^2) + weight_reg * sum(params^2) / numel
    as a single (1,1) f32 output.  Grid axis streams parameter chunks."""

    # Plain Python floats -> jaxpr literals, NOT captured traced constants.
    inv_slide = 1.0 / float(slide_batch)
    inv_move = 1.0 / float(move_batch)
    inv_value = 1.0 / float(value_n)
    reg_scale = float(weight_regularization) / float(numel)
    sub = chunk_rows // 8  # chunk_rows is always a multiple of 8

    def kernel(sp_ref, st_ref, mp_ref, mt_ref, vp_ref, vt_ref, p_ref,
               out_ref, ssq_acc):
        step = pl.program_id(0)

        @pl.when(step == 0)
        def _init():
            ssq_acc[...] = jnp.zeros_like(ssq_acc)

        # --- streamed regularizer: elementwise accumulate into (8,128) ----
        x = p_ref[...].astype(jnp.float32)                    # (chunk_rows, 128)
        sq = x * x
        # Tile-aligned reshape; the axis-0 sum is plain VALU adds (no XLU).
        ssq_acc[...] += jnp.sum(sq.reshape(sub, 8, 128), axis=0)

        # --- heads + finalize on the last grid step -----------------------
        @pl.when(step == pl.num_programs(0) - 1)
        def _finalize():
            def xent_sum(pred, tgt):
                # -sum(tgt * log_softmax(pred)) without materializing logp:
                #   per_row = sum(tgt) * lse - sum(tgt * shifted)
                pred = pred.astype(jnp.float32)
                tgt = tgt.astype(jnp.float32)
                m = jnp.max(pred, axis=-1, keepdims=True)
                shifted = pred - m
                lse = jnp.log(jnp.sum(jnp.exp(shifted), axis=-1,
                                      keepdims=True))
                tgt_sum = jnp.sum(tgt, axis=-1, keepdims=True)
                dot = jnp.sum(tgt * shifted, axis=-1, keepdims=True)
                return jnp.sum(tgt_sum * lse - dot)

            slide = xent_sum(sp_ref[...], st_ref[...]) * inv_slide
            move = xent_sum(mp_ref[...], mt_ref[...]) * inv_move

            # Value MSE (inputs pre-reshaped to lane-dense (1, B)).
            d = (vp_ref[...].astype(jnp.float32)
                 - vt_ref[...].astype(jnp.float32))
            mse = jnp.sum(d * d) * inv_value

            # Single lane+sublane reduction of the vector accumulator.
            reg = jnp.sum(ssq_acc[...]) * reg_scale

            out_ref[...] = jnp.reshape(slide + move + mse + reg, (1, 1))

    return kernel


# ---------------------------------------------------------------------------
# Parameter packing: one lane-dense, zero-padded, chunkable flat slab
# ---------------------------------------------------------------------------

def _pack_params(params, max_chunk_rows=2048):
    """Pack parameters into a (n_chunks * chunk_rows, 128) f32 slab.

    Zero padding contributes nothing to the sum-of-squares.  Returns
    (slab, numel, chunk_rows, n_chunks)."""
    flats = [jnp.ravel(p).astype(jnp.float32) for p in params]
    flat = flats[0] if len(flats) == 1 else jnp.concatenate(flats)
    numel = int(flat.shape[0])

    rows = -(-numel // 128)                      # ceil(numel / 128)
    rows8 = -(-rows // 8) * 8                    # round up to multiple of 8
    chunk_rows = min(max_chunk_rows, rows8)      # <= 1 MiB f32 per chunk
    n_chunks = -(-rows8 // chunk_rows)
    total_rows = n_chunks * chunk_rows

    pad = total_rows * 128 - numel
    if pad:
        flat = jnp.concatenate([flat, jnp.zeros((pad,), jnp.float32)])
    slab = flat.reshape(total_rows, 128)
    return slab, numel, chunk_rows, n_chunks


# ---------------------------------------------------------------------------
# Wrapper reproducing TheseusLoss.forward
# ---------------------------------------------------------------------------

def theseus_loss(slide_pred, slide_target, move_pred, move_target,
                 value_pred, value_target, params,
                 weight_regularization=1e-4):
    # Lane-dense layout for the value head: (B, 1) -> (1, B).
    vp = jnp.reshape(value_pred, (1, -1))
    vt = jnp.reshape(value_target, (1, -1))

    slab, numel, chunk_rows, n_chunks = _pack_params(params)

    kernel = _make_fused_kernel(
        chunk_rows=chunk_rows,
        slide_batch=slide_target.shape[0],
        move_batch=move_target.shape[0],
        value_n=int(value_pred.size),
        numel=numel,
        weight_regularization=weight_regularization,
    )

    heads = [slide_pred, slide_target, move_pred, move_target, vp, vt]

    # VMEM budget from actual resident bytes (2x for double buffering),
    # clamped so the same config works on v7x (64 MiB) and v5e/v6e (128 MiB),
    # while overriding v5e's 16 MiB scoped default.
    head_bytes = sum(int(h.size) * h.dtype.itemsize for h in heads)
    chunk_bytes = chunk_rows * 128 * 4
    needed = 2 * (head_bytes + chunk_bytes) + (1 << 20)
    vmem_limit = int(min(max(needed, 32 << 20), 48 << 20))

    def head_spec(arr):
        shape = arr.shape
        return pl.BlockSpec(shape, lambda i: tuple(0 for _ in shape))

    out = pl.pallas_call(
        kernel,
        out_shape=jax.ShapeDtypeStruct((1, 1), jnp.float32),
        grid=(n_chunks,),
        in_specs=[head_spec(h) for h in heads] + [
            pl.BlockSpec((chunk_rows, 128), lambda i: (i, 0)),
        ],
        out_specs=pl.BlockSpec((1, 1), lambda i: (0, 0)),
        scratch_shapes=[pltpu.VMEM((8, 128), jnp.float32)],
        compiler_params=pltpu.CompilerParams(
            dimension_semantics=("arbitrary",),
            vmem_limit_bytes=vmem_limit,
        ),
    )(*heads, slab)

    return out[0, 0]


# ---------------------------------------------------------------------------
# Pure-JAX reference for a correctness check
# ---------------------------------------------------------------------------

def theseus_loss_ref(slide_pred, slide_target, move_pred, move_target,
                     value_pred, value_target, params,
                     weight_regularization=1e-4):
    slide_loss = -jnp.sum(
        slide_target * jax.nn.log_softmax(slide_pred, axis=-1)
    ) / slide_target.shape[0]
    move_loss = -jnp.sum(
        move_target * jax.nn.log_softmax(move_pred, axis=-1)
    ) / move_target.shape[0]
    value_loss = jnp.mean((value_pred - value_target) ** 2)
    ssq = sum(jnp.sum(p.astype(jnp.float32) ** 2) for p in params)
    numel = sum(p.size for p in params)
    reg_loss = ssq / numel * weight_regularization
    return slide_loss + move_loss + value_loss + reg_loss


if __name__ == "__main__":
    key = jax.random.PRNGKey(0)
    ks = jax.random.split(key, 12)

    B = 8
    SLIDE_C = 128
    MOVE_C = 128

    slide_pred = jax.random.normal(ks[0], (B, SLIDE_C), jnp.float32)
    slide_target = jax.nn.softmax(
        jax.random.normal(ks[1], (B, SLIDE_C), jnp.float32), axis=-1)
    move_pred = jax.random.normal(ks[2], (B, MOVE_C), jnp.float32)
    move_target = jax.nn.softmax(
        jax.random.normal(ks[3], (B, MOVE_C), jnp.float32), axis=-1)
    value_pred = jax.random.normal(ks[4], (B, 1), jnp.float32)
    value_target = jax.random.normal(ks[5], (B, 1), jnp.float32)

    # Deterministic synthetic "model" parameters (a small MLP's weights),
    # including narrow-last-dim / 1-D tensors to exercise the packing path.
    params = [
        0.1 * jax.random.normal(ks[6], (64, 128), jnp.float32),   # w1
        0.1 * jax.random.normal(ks[7], (128,), jnp.float32),      # b1
        0.1 * jax.random.normal(ks[8], (128, 128), jnp.float32),  # w2
        0.1 * jax.random.normal(ks[9], (128,), jnp.float32),      # b2
        0.1 * jax.random.normal(ks[10], (128, 1), jnp.float32),   # w3
        0.1 * jax.random.normal(ks[11], (1,), jnp.float32),       # b3
    ]

    out = theseus_loss(slide_pred, slide_target, move_pred, move_target,
                       value_pred, value_target, params)
    out = jax.block_until_ready(out)

    ref = theseus_loss_ref(slide_pred, slide_target, move_pred, move_target,
                           value_pred, value_target, params)
    assert jnp.allclose(out, ref, rtol=1e-5, atol=1e-5), (out, ref)

    print("KERNEL_OK")
</pallas_src>

<mosaic_0001>
module attributes {stable_mosaic.version = 11 : i64} {
  func.func @kernel(%arg0: i32, %arg1: memref<8x128xf32, #tpu.memory_space<vmem>>, %arg2: memref<8x128xf32, #tpu.memory_space<vmem>>, %arg3: memref<8x128xf32, #tpu.memory_space<vmem>>, %arg4: memref<8x128xf32, #tpu.memory_space<vmem>>, %arg5: memref<1x8xf32, #tpu.memory_space<vmem>>, %arg6: memref<1x8xf32, #tpu.memory_space<vmem>>, %arg7: memref<200x128xf32, #tpu.memory_space<vmem>>, %arg8: memref<1x1xf32, #tpu.memory_space<vmem>>, %arg9: memref<8x128xf32, #tpu.memory_space<vmem>>) attributes {dimension_semantics = [#tpu.dimension_semantics<arbitrary>], iteration_bounds = array<i64: 1>, scalar_prefetch = 0 : i64, scratch_operands = 1 : i64, tpu.core_type = #tpu.core_type<tc>, window_params = [{pipeline_mode = #tpu.pipeline_mode<synchronous>, transform_indices = @transform_0, window_bounds = array<i64: 8, 128>}, {pipeline_mode = #tpu.pipeline_mode<synchronous>, transform_indices = @transform_1, window_bounds = array<i64: 8, 128>}, {pipeline_mode = #tpu.pipeline_mode<synchronous>, transform_indices = @transform_2, window_bounds = array<i64: 8, 128>}, {pipeline_mode = #tpu.pipeline_mode<synchronous>, transform_indices = @transform_3, window_bounds = array<i64: 8, 128>}, {pipeline_mode = #tpu.pipeline_mode<synchronous>, transform_indices = @transform_4, window_bounds = array<i64: 1, 8>}, {pipeline_mode = #tpu.pipeline_mode<synchronous>, transform_indices = @transform_5, window_bounds = array<i64: 1, 8>}, {transform_indices = @transform_6, window_bounds = array<i64: 200, 128>}, {pipeline_mode = #tpu.pipeline_mode<synchronous>, transform_indices = @transform_7, window_bounds = array<i64: 1, 1>}]} {
    %c0_i32 = arith.constant 0 : i32
    %0 = arith.cmpi eq, %arg0, %c0_i32 : i32
    %1 = arith.extui %0 : i1 to i32
    %c0_i32_0 = arith.constant 0 : i32
    %2 = arith.cmpi ne, %1, %c0_i32_0 : i32
    scf.if %2 {
      %cst_8 = arith.constant 0.000000e+00 : f32
      %13 = vector.broadcast %cst_8 : f32 to vector<8x128xf32>
      %c0_9 = arith.constant 0 : index
      %c0_10 = arith.constant 0 : index
      %14 = vector.load %arg9[%c0_9, %c0_10] : memref<8x128xf32, #tpu.memory_space<vmem>>, vector<8x128xf32>
      tpu.vector_store %arg9[%c0_9, %c0_10], %13 {strides = array<i32>} : memref<8x128xf32, #tpu.memory_space<vmem>>, vector<8x128xf32>,
    } else {
    }
    %c0 = arith.constant 0 : index
    %c0_1 = arith.constant 0 : index
    %3 = vector.load %arg7[%c0, %c0_1] : memref<200x128xf32, #tpu.memory_space<vmem>>, vector<200x128xf32>
    %4 = arith.mulf %3, %3 : vector<200x128xf32>
    %c0_2 = arith.constant 0 : index
    %c0_3 = arith.constant 0 : index
    %5 = vector.load %arg9[%c0_2, %c0_3] : memref<8x128xf32, #tpu.memory_space<vmem>>, vector<8x128xf32>
    %6 = vector.shape_cast %4 : vector<200x128xf32> to vector<25x8x128xf32>
    %cst = arith.constant dense<0.000000e+00> : vector<8x128xf32>
    %7 = vector.multi_reduction <add>, %6, %cst [0] : vector<25x8x128xf32> to vector<8x128xf32>
    %8 = arith.addf %5, %7 : vector<8x128xf32>
    %c0_4 = arith.constant 0 : index
    %c0_5 = arith.constant 0 : index
    %9 = vector.load %arg9[%c0_4, %c0_5] : memref<8x128xf32, #tpu.memory_space<vmem>>, vector<8x128xf32>
    tpu.vector_store %arg9[%c0_4, %c0_5], %8 {strides = array<i32>} : memref<8x128xf32, #tpu.memory_space<vmem>>, vector<8x128xf32>,
    %c0_i32_6 = arith.constant 0 : i32
    %10 = arith.cmpi eq, %arg0, %c0_i32_6 : i32
    %11 = arith.extui %10 : i1 to i32
    %c0_i32_7 = arith.constant 0 : i32
    %12 = arith.cmpi ne, %11, %c0_i32_7 : i32
    scf.if %12 {
      %c0_8 = arith.constant 0 : index
      %c0_9 = arith.constant 0 : index
      %13 = vector.load %arg1[%c0_8, %c0_9] : memref<8x128xf32, #tpu.memory_space<vmem>>, vector<8x128xf32>
      %c0_10 = arith.constant 0 : index
      %c0_11 = arith.constant 0 : index
      %14 = vector.load %arg2[%c0_10, %c0_11] : memref<8x128xf32, #tpu.memory_space<vmem>>, vector<8x128xf32>
      %cst_12 = arith.constant dense<0xFF800000> : vector<8xf32>
      %15 = vector.multi_reduction <maximumf>, %13, %cst_12 [1] : vector<8x128xf32> to vector<8xf32>
      %16 = vector.shape_cast %15 : vector<8xf32> to vector<8x1xf32>
      %17 = vector.broadcast %16 : vector<8x1xf32> to vector<8x128xf32>
      %18 = arith.subf %13, %17 : vector<8x128xf32>
      %19 = math.exp %18 : vector<8x128xf32>
      %cst_13 = arith.constant dense<0.000000e+00> : vector<8xf32>
      %20 = vector.multi_reduction <add>, %19, %cst_13 [1] : vector<8x128xf32> to vector<8xf32>
      %21 = vector.shape_cast %20 : vector<8xf32> to vector<8x1xf32>
      %22 = math.log %21 : vector<8x1xf32>
      %cst_14 = arith.constant dense<0.000000e+00> : vector<8xf32>
      %23 = vector.multi_reduction <add>, %14, %cst_14 [1] : vector<8x128xf32> to vector<8xf32>
      %24 = vector.shape_cast %23 : vector<8xf32> to vector<8x1xf32>
      %25 = arith.mulf %14, %18 : vector<8x128xf32>
      %cst_15 = arith.constant dense<0.000000e+00> : vector<8xf32>
      %26 = vector.multi_reduction <add>, %25, %cst_15 [1] : vector<8x128xf32> to vector<8xf32>
      %27 = vector.shape_cast %26 : vector<8xf32> to vector<8x1xf32>
      %28 = arith.mulf %24, %22 : vector<8x1xf32>
      %29 = arith.subf %28, %27 : vector<8x1xf32>
      %30 = vector.shape_cast %29 : vector<8x1xf32> to vector<1x8x1xf32>
      %cst_16 = arith.constant dense<0.000000e+00> : vector<1xf32>
      %31 = vector.multi_reduction <add>, %30, %cst_16 [1, 2] : vector<1x8x1xf32> to vector<1xf32>
      %32 = vector.shape_cast %31 : vector<1xf32> to vector<1x1x1xf32>
      %33 = vector.extract %32[0, 0, 0] : f32 from vector<1x1x1xf32>
      %cst_17 = arith.constant 1.250000e-01 : f32
      %34 = arith.mulf %33, %cst_17 : f32
      %c0_18 = arith.constant 0 : index
      %c0_19 = arith.constant 0 : index
      %35 = vector.load %arg3[%c0_18, %c0_19] : memref<8x128xf32, #tpu.memory_space<vmem>>, vector<8x128xf32>
      %c0_20 = arith.constant 0 : index
      %c0_21 = arith.constant 0 : index
      %36 = vector.load %arg4[%c0_20, %c0_21] : memref<8x128xf32, #tpu.memory_space<vmem>>, vector<8x128xf32>
      %cst_22 = arith.constant dense<0xFF800000> : vector<8xf32>
      %37 = vector.multi_reduction <maximumf>, %35, %cst_22 [1] : vector<8x128xf32> to vector<8xf32>
      %38 = vector.shape_cast %37 : vector<8xf32> to vector<8x1xf32>
      %39 = vector.broadcast %38 : vector<8x1xf32> to vector<8x128xf32>
      %40 = arith.subf %35, %39 : vector<8x128xf32>
      %41 = math.exp %40 : vector<8x128xf32>
      %cst_23 = arith.constant dense<0.000000e+00> : vector<8xf32>
      %42 = vector.multi_reduction <add>, %41, %cst_23 [1] : vector<8x128xf32> to vector<8xf32>
      %43 = vector.shape_cast %42 : vector<8xf32> to vector<8x1xf32>
      %44 = math.log %43 : vector<8x1xf32>
      %cst_24 = arith.constant dense<0.000000e+00> : vector<8xf32>
      %45 = vector.multi_reduction <add>, %36, %cst_24 [1] : vector<8x128xf32> to vector<8xf32>
      %46 = vector.shape_cast %45 : vector<8xf32> to vector<8x1xf32>
      %47 = arith.mulf %36, %40 : vector<8x128xf32>
      %cst_25 = arith.constant dense<0.000000e+00> : vector<8xf32>
      %48 = vector.multi_reduction <add>, %47, %cst_25 [1] : vector<8x128xf32> to vector<8xf32>
      %49 = vector.shape_cast %48 : vector<8xf32> to vector<8x1xf32>
      %50 = arith.mulf %46, %44 : vector<8x1xf32>
      %51 = arith.subf %50, %49 : vector<8x1xf32>
      %52 = vector.shape_cast %51 : vector<8x1xf32> to vector<1x8x1xf32>
      %cst_26 = arith.constant dense<0.000000e+00> : vector<1xf32>
      %53 = vector.multi_reduction <add>, %52, %cst_26 [1, 2] : vector<1x8x1xf32> to vector<1xf32>
      %54 = vector.shape_cast %53 : vector<1xf32> to vector<1x1x1xf32>
      %55 = vector.extract %54[0, 0, 0] : f32 from vector<1x1x1xf32>
      %cst_27 = arith.constant 1.250000e-01 : f32
      %56 = arith.mulf %55, %cst_27 : f32
      %c0_28 = arith.constant 0 : index
      %c0_29 = arith.constant 0 : index
      %57 = vector.load %arg5[%c0_28, %c0_29] : memref<1x8xf32, #tpu.memory_space<vmem>>, vector<1x8xf32>
      %c0_30 = arith.constant 0 : index
      %c0_31 = arith.constant 0 : index
      %58 = vector.load %arg6[%c0_30, %c0_31] : memref<1x8xf32, #tpu.memory_space<vmem>>, vector<1x8xf32>
      %59 = arith.subf %57, %58 : vector<1x8xf32>
      %60 = arith.mulf %59, %59 : vector<1x8xf32>
      %61 = vector.shape_cast %60 : vector<1x8xf32> to vector<1x1x8xf32>
      %cst_32 = arith.constant dense<0.000000e+00> : vector<1xf32>
      %62 = vector.multi_reduction <add>, %61, %cst_32 [1, 2] : vector<1x1x8xf32> to vector<1xf32>
      %63 = vector.shape_cast %62 : vector<1xf32> to vector<1x1x1xf32>
      %64 = vector.extract %63[0, 0, 0] : f32 from vector<1x1x1xf32>
      %cst_33 = arith.constant 1.250000e-01 : f32
      %65 = arith.mulf %64, %cst_33 : f32
      %c0_34 = arith.constant 0 : index
      %c0_35 = arith.constant 0 : index
      %66 = vector.load %arg9[%c0_34, %c0_35] : memref<8x128xf32, #tpu.memory_space<vmem>>, vector<8x128xf32>
      %67 = vector.shape_cast %66 : vector<8x128xf32> to vector<1x8x128xf32>
      %cst_36 = arith.constant dense<0.000000e+00> : vector<1xf32>
      %68 = vector.multi_reduction <add>, %67, %cst_36 [1, 2] : vector<1x8x128xf32> to vector<1xf32>
      %69 = vector.shape_cast %68 : vector<1xf32> to vector<1x1x1xf32>
      %70 = vector.extract %69[0, 0, 0] : f32 from vector<1x1x1xf32>
      %cst_37 = arith.constant 4.00624955E-9 : f32
      %71 = arith.mulf %70, %cst_37 : f32
      %72 = arith.addf %34, %56 : f32
      %73 = arith.addf %72, %65 : f32
      %74 = arith.addf %73, %71 : f32
      %75 = vector.broadcast %74 : f32 to vector<1x1xf32>
      %c0_38 = arith.constant 0 : index
      %c0_39 = arith.constant 0 : index
      %76 = vector.load %arg8[%c0_38, %c0_39] : memref<1x1xf32, #tpu.memory_space<vmem>>, vector<1x1xf32>
      tpu.vector_store %arg8[%c0_38, %c0_39], %75 {strides = array<i32>} : memref<1x1xf32, #tpu.memory_space<vmem>>, vector<1x1xf32>,
    } else {
    }
    return
  }
  func.func @transform_0(%arg0: i32) -> (i32, i32) {
    %c0_i32 = arith.constant 0 : i32
    %c0_i32_0 = arith.constant 0 : i32
    %c0_i32_1 = arith.constant 0 : i32
    return %c0_i32, %c0_i32_0 : i32, i32
  }
  func.func @transform_1(%arg0: i32) -> (i32, i32) {
    %c0_i32 = arith.constant 0 : i32
    %c0_i32_0 = arith.constant 0 : i32
    %c0_i32_1 = arith.constant 0 : i32
    return %c0_i32, %c0_i32_0 : i32, i32
  }
  func.func @transform_2(%arg0: i32) -> (i32, i32) {
    %c0_i32 = arith.constant 0 : i32
    %c0_i32_0 = arith.constant 0 : i32
    %c0_i32_1 = arith.constant 0 : i32
    return %c0_i32, %c0_i32_0 : i32, i32
  }
  func.func @transform_3(%arg0: i32) -> (i32, i32) {
    %c0_i32 = arith.constant 0 : i32
    %c0_i32_0 = arith.constant 0 : i32
    %c0_i32_1 = arith.constant 0 : i32
    return %c0_i32, %c0_i32_0 : i32, i32
  }
  func.func @transform_4(%arg0: i32) -> (i32, i32) {
    %c0_i32 = arith.constant 0 : i32
    %c0_i32_0 = arith.constant 0 : i32
    %c0_i32_1 = arith.constant 0 : i32
    return %c0_i32, %c0_i32_0 : i32, i32
  }
  func.func @transform_5(%arg0: i32) -> (i32, i32) {
    %c0_i32 = arith.constant 0 : i32
    %c0_i32_0 = arith.constant 0 : i32
    %c0_i32_1 = arith.constant 0 : i32
    return %c0_i32, %c0_i32_0 : i32, i32
  }
  func.func @transform_6(%arg0: i32) -> (i32, i32) {
    %c0_i32 = arith.constant 0 : i32
    %c0_i32_0 = arith.constant 0 : i32
    return %arg0, %c0_i32 : i32, i32
  }
  func.func @transform_7(%arg0: i32) -> (i32, i32) {
    %c0_i32 = arith.constant 0 : i32
    %c0_i32_0 = arith.constant 0 : i32
    %c0_i32_1 = arith.constant 0 : i32
    return %c0_i32, %c0_i32_0 : i32, i32
  }
}

</mosaic_0001>

<llo_original>
// kernel: tpu_custom_call.1
$region0: #{tpu_custom_call.1}
  #allocation0 [shape = 'u32[]', space=smem, size = 0x4, offset = 0x4, fixed_abs, tag = 'smem constant byte address 0x4 - core index']
  #allocation1 [shape = 'u32[144,128]{1,0:T(1,128)}', space=vmem, size = 0x12000, scoped, tag = 'internal scratch']
  #allocation2 [shape = 'f32[8,128]{1,0:T(8,128)}', space=vmem, size = 0x1000, scoped, tag = 'scratch operand']
  %s0 = inlined_call_operand.hbm [shape: f32[8,128], index: 0, kind: input, shape index: {}]
  %s1 = inlined_call_operand.hbm [shape: f32[8,128], index: 1, kind: input, shape index: {}]
  %s2 = inlined_call_operand.hbm [shape: f32[8,128], index: 2, kind: input, shape index: {}]
  %s3 = inlined_call_operand.hbm [shape: f32[8,128], index: 3, kind: input, shape index: {}]
  %s4 = inlined_call_operand.vmem [shape: f32[1,8], index: 4, kind: input, shape index: {}]
  %s5 = inlined_call_operand.vmem [shape: f32[1,8], index: 5, kind: input, shape index: {}]
  %s6 = inlined_call_operand.hbm [shape: f32[200,128], index: 6, kind: input, shape index: {}]
  %s7 = inlined_call_operand.hbm [shape: f32[1,1], index: 7, kind: output, shape index: {}]
  %s8 = sld [smem:[#allocation0]]
  $region66: #{tpu_custom_call.1} parent=0
    _
  %s10 = ssub.s32 1, %s8
  %s11 = scalar_select 0, %s10, %s8
  $region1: #{tpu_custom_call.1} parent=0
    #allocation3 [shape = 'u8[4096]{0}', space=vmem, size = 0x1000, scoped, tag = 'input window, operand 0, single buffered']
    #allocation4 [shape = 's32[1]{0}', space=sflag, size = 0x4, scoped, tag = 'scoped memory for tpu_custom_call.1']
    #allocation5 [shape = 's32[1]{0}', space=sflag, size = 0x4, scoped, tag = 'scoped memory for tpu_custom_call.1']
    #allocation6 [shape = 'u8[4096]{0}', space=vmem, size = 0x1000, scoped, tag = 'input window, operand 1, single buffered']
    #allocation7 [shape = 's32[1]{0}', space=sflag, size = 0x4, scoped, tag = 'scoped memory for tpu_custom_call.1']
    #allocation8 [shape = 'u8[4096]{0}', space=vmem, size = 0x1000, scoped, tag = 'input window, operand 2, single buffered']
    #allocation9 [shape = 'u8[4096]{0}', space=vmem, size = 0x1000, scoped, tag = 'input window, operand 3, single buffered']
    #allocation10 [shape = 's32[1]{0}', space=sflag, size = 0x4, scoped, tag = 'scoped memory for tpu_custom_call.1']
    #allocation11 [shape = 'u8[102400]{0}', space=vmem, size = 0x19000, scoped, tag = 'input window, operand 6, single buffered']
    #allocation12 [shape = 'u8[512]{0}', space=vmem, size = 0x400, scoped, tag = 'output window, operand 0, single buffered']
    %12 = vsyncpa [#allocation4], 0
    %13 = vsyncpa [#allocation7], 0
    %14 = vsyncpa [#allocation10], 0
    %15 = vsyncpa [#allocation5], 0
    // Predicated region
    $region2: #{tpu_custom_call.1} parent=1 // pred_check
      _
    $region3: #{tpu_custom_call.1} parent=1 // pred_check_branch
      %17 = sbr.rel (0) target = $region5
    $region4: #{tpu_custom_call.1} parent=1 // pred_region
      %s19 = ssub.s32 128, 128
      %20 = vsyncadd [#allocation4], %s19
      %s22 = sshll.u32 [#allocation3], 4
      %s23 = int_to_ptr.vmem [resolvable:$true] %s22
      %25 = dma.hbm_to_vmem [thread:$0]  %s0, 128, %s23, [#allocation4]
    $region5: #{tpu_custom_call.1} parent=1 // pred_fallthru
      _
    // Predicated region
    $region6: #{tpu_custom_call.1} parent=1 // pred_check
      _
    $region7: #{tpu_custom_call.1} parent=1 // pred_check_branch
      %27 = sbr.rel (0) target = $region9
    $region8: #{tpu_custom_call.1} parent=1 // pred_region
      %s29 = ssub.s32 128, 128
      %30 = vsyncadd [#allocation7], %s29
      %s32 = sshll.u32 [#allocation6], 4
      %s33 = int_to_ptr.vmem [resolvable:$true] %s32
      %35 = dma.hbm_to_vmem [thread:$0]  %s1, 128, %s33, [#allocation7]
    $region9: #{tpu_custom_call.1} parent=1 // pred_fallthru
      _
    // Predicated region
    $region10: #{tpu_custom_call.1} parent=1 // pred_check
      _
    $region11: #{tpu_custom_call.1} parent=1 // pred_check_branch
      %37 = sbr.rel (0) target = $region13
    $region12: #{tpu_custom_call.1} parent=1 // pred_region
      %s39 = ssub.s32 128, 128
      %40 = vsyncadd [#allocation7], %s39
      %s42 = sshll.u32 [#allocation8], 4
      %s43 = int_to_ptr.vmem [resolvable:$true] %s42
      %45 = dma.hbm_to_vmem [thread:$0]  %s2, 128, %s43, [#allocation7]
    $region13: #{tpu_custom_call.1} parent=1 // pred_fallthru
      _
    // Predicated region
    $region14: #{tpu_custom_call.1} parent=1 // pred_check
      _
    $region15: #{tpu_custom_call.1} parent=1 // pred_check_branch
      %47 = sbr.rel (0) target = $region17
    $region16: #{tpu_custom_call.1} parent=1 // pred_region
      %s49 = ssub.s32 128, 128
      %50 = vsyncadd [#allocation10], %s49
      %s52 = sshll.u32 [#allocation9], 4
      %s53 = int_to_ptr.vmem [resolvable:$true] %s52
      %55 = dma.hbm_to_vmem [thread:$0]  %s3, 128, %s53, [#allocation10]
    $region17: #{tpu_custom_call.1} parent=1 // pred_fallthru
      _
    // Predicated region
    $region18: #{tpu_custom_call.1} parent=1 // pred_check
      _
    $region19: #{tpu_custom_call.1} parent=1 // pred_check_branch
      %57 = sbr.rel (0) target = $region21
    $region20: #{tpu_custom_call.1} parent=1 // pred_region
      _
    $region21: #{tpu_custom_call.1} parent=1 // pred_fallthru
      _
    // Predicated region
    $region22: #{tpu_custom_call.1} parent=1 // pred_check
      _
    $region23: #{tpu_custom_call.1} parent=1 // pred_check_branch
      %59 = sbr.rel (0) target = $region25
    $region24: #{tpu_custom_call.1} parent=1 // pred_region
      _
    $region25: #{tpu_custom_call.1} parent=1 // pred_fallthru
      _
    // Predicated region
    $region26: #{tpu_custom_call.1} parent=1 // pred_check
      _
    $region27: #{tpu_custom_call.1} parent=1 // pred_check_branch
      %61 = sbr.rel (0) target = $region29
    $region28: #{tpu_custom_call.1} parent=1 // pred_region
      %s63 = ssub.s32 3200, 3200
      %64 = vsyncadd [#allocation10], %s63
      %s65 = sshll.u32 [#allocation11], 4
      %s66 = int_to_ptr.vmem [resolvable:$true] %s65
      %71 = dma.hbm_to_vmem [thread:$0]  %s6, 3200, %s66, [#allocation10], 128, 128, 8
    $region29: #{tpu_custom_call.1} parent=1 // pred_fallthru
      _
    // Predicated region
    $region30: #{tpu_custom_call.1} parent=1 // pred_check
      _
    $region31: #{tpu_custom_call.1} parent=1 // pred_check_branch
      %73 = sbr.rel (0) target = $region33
    $region32: #{tpu_custom_call.1} parent=1 // pred_region
      %74 = dma.done [#allocation4], 128
    $region33: #{tpu_custom_call.1} parent=1 // pred_fallthru
      _
    // Predicated region
    $region34: #{tpu_custom_call.1} parent=1 // pred_check
      _
    $region35: #{tpu_custom_call.1} parent=1 // pred_check_branch
      %76 = sbr.rel (0) target = $region37
    $region36: #{tpu_custom_call.1} parent=1 // pred_region
      %77 = dma.done [#allocation7], 128
    $region37: #{tpu_custom_call.1} parent=1 // pred_fallthru
      _
    // Predicated region
    $region38: #{tpu_custom_call.1} parent=1 // pred_check
      _
    $region39: #{tpu_custom_call.1} parent=1 // pred_check_branch
      %79 = sbr.rel (0) target = $region41
    $region40: #{tpu_custom_call.1} parent=1 // pred_region
      %80 = dma.done [#allocation7], 128
    $region41: #{tpu_custom_call.1} parent=1 // pred_fallthru
      _
    // Predicated region
    $region42: #{tpu_custom_call.1} parent=1 // pred_check
      _
    $region43: #{tpu_custom_call.1} parent=1 // pred_check_branch
      %82 = sbr.rel (0) target = $region45
    $region44: #{tpu_custom_call.1} parent=1 // pred_region
      %83 = dma.done [#allocation10], 128
    $region45: #{tpu_custom_call.1} parent=1 // pred_fallthru
      _
    // Predicated region
    $region46: #{tpu_custom_call.1} parent=1 // pred_check
      _
    $region47: #{tpu_custom_call.1} parent=1 // pred_check_branch
      %85 = sbr.rel (0) target = $region49
    $region48: #{tpu_custom_call.1} parent=1 // pred_region
      %86 = dma.done [#allocation10], 3200
    $region49: #{tpu_custom_call.1} parent=1 // pred_fallthru
      _
    %p87 = scmp.eq.s32.totalorder 0, 0
    // Predicated region
    $region50: #{tpu_custom_call.1} parent=1 // pred_check
      %p88 = pneg %p87
    $region51: #{tpu_custom_call.1} parent=1 // pred_check_branch
      %90 = sbr.rel (%p88) target = $region53
    $region52: #{tpu_custom_call.1} parent=1 // pred_region
      %91 = vst [vmem:[#allocation2] sm:$0xff] 0.0
    $region53: #{tpu_custom_call.1} parent=1 // pred_fallthru
      _
    %v92 = vld [vmem:[#allocation11] sm:$0xff]
    %v93 = vld [vmem:[#allocation11 + $0x8] sm:$0xff]
    %v94 = vld [vmem:[#allocation11 + $0x10] sm:$0xff]
    %v95 = vld [vmem:[#allocation11 + $0x18] sm:$0xff]
    %v96 = vld [vmem:[#allocation11 + $0x20] sm:$0xff]
    %v97 = vld [vmem:[#allocation11 + $0x28] sm:$0xff]
    %v98 = vld [vmem:[#allocation11 + $0x30] sm:$0xff]
    %v99 = vld [vmem:[#allocation11 + $0x38] sm:$0xff]
    %v100 = vld [vmem:[#allocation11 + $0x40] sm:$0xff]
    %v101 = vld [vmem:[#allocation11 + $0x48] sm:$0xff]
    %v102 = vld [vmem:[#allocation11 + $0x50] sm:$0xff]
    %v103 = vld [vmem:[#allocation11 + $0x58] sm:$0xff]
    %v104 = vld [vmem:[#allocation11 + $0x60] sm:$0xff]
    %v105 = vld [vmem:[#allocation11 + $0x68] sm:$0xff]
    %v106 = vld [vmem:[#allocation11 + $0x70] sm:$0xff]
    %v107 = vld [vmem:[#allocation11 + $0x78] sm:$0xff]
    %v108 = vld [vmem:[#allocation11 + $0x80] sm:$0xff]
    %v109 = vld [vmem:[#allocation11 + $0x88] sm:$0xff]
    %v110 = vld [vmem:[#allocation11 + $0x90] sm:$0xff]
    %v111 = vld [vmem:[#allocation11 + $0x98] sm:$0xff]
    %v112 = vld [vmem:[#allocation11 + $0xa0] sm:$0xff]
    %v113 = vld [vmem:[#allocation11 + $0xa8] sm:$0xff]
    %v114 = vld [vmem:[#allocation11 + $0xb0] sm:$0xff]
    %v115 = vld [vmem:[#allocation11 + $0xb8] sm:$0xff]
    %v116 = vld [vmem:[#allocation11 + $0xc0] sm:$0xff]
    %v117 = vmul.f32 %v92, %v92
    %v118 = vmul.f32 %v93, %v93
    %v119 = vmul.f32 %v94, %v94
    %v120 = vmul.f32 %v95, %v95
    %v121 = vmul.f32 %v96, %v96
    %v122 = vmul.f32 %v97, %v97
    %v123 = vmul.f32 %v98, %v98
    %v124 = vmul.f32 %v99, %v99
    %v125 = vmul.f32 %v100, %v100
    %v126 = vmul.f32 %v101, %v101
    %v127 = vmul.f32 %v102, %v102
    %v128 = vmul.f32 %v103, %v103
    %v129 = vmul.f32 %v104, %v104
    %v130 = vmul.f32 %v105, %v105
    %v131 = vmul.f32 %v106, %v106
    %v132 = vmul.f32 %v107, %v107
    %v133 = vmul.f32 %v108, %v108
    %v134 = vmul.f32 %v109, %v109
    %v135 = vmul.f32 %v110, %v110
    %v136 = vmul.f32 %v111, %v111
    %v137 = vmul.f32 %v112, %v112
    %v138 = vmul.f32 %v113, %v113
    %v139 = vmul.f32 %v114, %v114
    %v140 = vmul.f32 %v115, %v115
    %v141 = vmul.f32 %v116, %v116
    %v142 = vld [vmem:[#allocation2] sm:$0xff]
    %v143 = vadd.f32 %v117, %v118
    %v144 = vadd.f32 %v143, %v119
    %v145 = vadd.f32 %v144, %v120
    %v146 = vadd.f32 %v145, %v121
    %v147 = vadd.f32 %v146, %v122
    %v148 = vadd.f32 %v147, %v123
    %v149 = vadd.f32 %v148, %v124
    %v150 = vadd.f32 %v149, %v125
    %v151 = vadd.f32 %v150, %v126
    %v152 = vadd.f32 %v151, %v127
    %v153 = vadd.f32 %v152, %v128
    %v154 = vadd.f32 %v153, %v129
    %v155 = vadd.f32 %v154, %v130
    %v156 = vadd.f32 %v155, %v131
    %v157 = vadd.f32 %v156, %v132
    %v158 = vadd.f32 %v157, %v133
    %v159 = vadd.f32 %v158, %v134
    %v160 = vadd.f32 %v159, %v135
    %v161 = vadd.f32 %v160, %v136
    %v162 = vadd.f32 %v161, %v137
    %v163 = vadd.f32 %v162, %v138
    %v164 = vadd.f32 %v163, %v139
    %v165 = vadd.f32 %v164, %v140
    %v166 = vadd.f32 %v165, %v141
    %v167 = vadd.f32 %v142, %v166
    %168 = vst [vmem:[#allocation2] sm:$0xff] %v167
    // Predicated region
    $region54: #{tpu_custom_call.1} parent=1 // pred_check
      %p169 = pneg %p87
    $region55: #{tpu_custom_call.1} parent=1 // pred_check_branch
      %171 = sbr.rel (%p169) target = $region57
    $region56: #{tpu_custom_call.1} parent=1 // pred_region
      %v172 = vld [vmem:[#allocation3] sm:$0xff]
      %v173 = vld [vmem:[#allocation6] sm:$0xff]
      %174 = vmax.xlane.f32.xlu0 %v172
      %v175 = vpop.xlane.xlu0 %174
      %v176 = vsub.f32 %v172, %v175
      %v177 = vmul.f32 %v176, 1.442695
      %v178 = vpow.pop %v177
      %179 = vadd.xlane.f32.xlu0 %v178
      %v180 = vpop.xlane.xlu0 %179
      %v181 = vlog2.pop %v180
      %v182 = vmul.f32 %v181, 0.6931472
      %183 = vadd.xlane.f32.xlu0 %v173
      %v184 = vpop.xlane.xlu0 %183
      %v185 = vmul.f32 %v173, %v176
      %186 = vadd.xlane.f32.xlu0 %v185
      %v187 = vpop.xlane.xlu0 %186
      %v188 = vmul.f32 %v184, %v182
      %v189 = vsub.f32 %v188, %v187
      %vm190 = vcmask 7168
      %v191 = vsel %vm190, %v189, 0.0
      %192 = vadd.xlane.f32.xlu0 %v191
      %v193 = vpop.xlane.xlu0 %192
      %v194 = vrot.slane %v193, 4
      %v195 = vadd.f32 %v193, %v194
      %v196 = vrot.slane %v195, 2
      %v197 = vadd.f32 %v195, %v196
      %v198 = vrot.slane %v197, 1
      %v199 = vadd.f32 %v197, %v198
      %s200 = vtos %v199
      %s201 = smul.f32 %s200, 0.125
      %v202 = vld [vmem:[#allocation8] sm:$0xff]
      %v203 = vld [vmem:[#allocation9] sm:$0xff]
      %204 = vmax.xlane.f32.xlu0 %v202
      %v205 = vpop.xlane.xlu0 %204
      %v206 = vsub.f32 %v202, %v205
      %v207 = vmul.f32 %v206, 1.442695
      %v208 = vpow.pop %v207
      %209 = vadd.xlane.f32.xlu0 %v208
      %v210 = vpop.xlane.xlu0 %209
      %v211 = vlog2.pop %v210
      %v212 = vmul.f32 %v211, 0.6931472
      %213 = vadd.xlane.f32.xlu0 %v203
      %v214 = vpop.xlane.xlu0 %213
      %v215 = vmul.f32 %v203, %v206
      %216 = vadd.xlane.f32.xlu0 %v215
      %v217 = vpop.xlane.xlu0 %216
      %v218 = vmul.f32 %v214, %v212
      %v219 = vsub.f32 %v218, %v217
      %v220 = vsel %vm190, %v219, 0.0
      %221 = vadd.xlane.f32.xlu0 %v220
      %v222 = vpop.xlane.xlu0 %221
      %v223 = vrot.slane %v222, 4
      %v224 = vadd.f32 %v222, %v223
      %v225 = vrot.slane %v224, 2
      %v226 = vadd.f32 %v224, %v225
      %v227 = vrot.slane %v226, 1
      %v228 = vadd.f32 %v226, %v227
      %s229 = vtos %v228
      %s230 = smul.f32 %s229, 0.125
      %v231 = vld [vmem:[%s4] sm:$0x1]
      %v232 = vld [vmem:[%s5] sm:$0x1]
      %v233 = vsub.f32 %v231, %v232
      %v234 = vmul.f32 %v233, %v233
      %vm235 = vcmask 57344
      %v236 = vsel %vm235, %v234, 0.0
      %237 = vadd.xlane.f32.xlu0 %v236
      %v238 = vpop.xlane.xlu0 %237
      %v239 = vrot.slane %v238, 4
      %v240 = vadd.f32 %v238, %v239
      %v241 = vrot.slane %v240, 2
      %v242 = vadd.f32 %v240, %v241
      %v243 = vrot.slane %v242, 1
      %v244 = vadd.f32 %v242, %v243
      %s245 = vtos %v244
      %s246 = smul.f32 %s245, 0.125
      %v247 = vld [vmem:[#allocation2] sm:$0xff]
      %248 = vadd.xlane.f32.xlu0 %v247
      %v249 = vpop.xlane.xlu0 %248
      %v250 = vrot.slane %v249, 4
      %v251 = vadd.f32 %v249, %v250
      %v252 = vrot.slane %v251, 2
      %v253 = vadd.f32 %v251, %v252
      %v254 = vrot.slane %v253, 1
      %v255 = vadd.f32 %v253, %v254
      %s256 = vtos %v255
      %s257 = smul.f32 %s256, 4.0062496e-09
      %s258 = sadd.f32 %s201, %s230
      %s259 = sadd.f32 %s258, %s246
      %s260 = sadd.f32 %s259, %s257
      %v261 = vstv %s260
      %vm262 = vcmask 0
      %263 = vst.msk [vmem:[#allocation12] sm:$0x1] %vm262, %v261
    $region57: #{tpu_custom_call.1} parent=1 // pred_fallthru
      _
    // Predicated region
    $region58: #{tpu_custom_call.1} parent=1 // pred_check
      _
    $region59: #{tpu_custom_call.1} parent=1 // pred_check_branch
      %265 = sbr.rel (0) target = $region61
    $region60: #{tpu_custom_call.1} parent=1 // pred_region
      %s267 = ssub.s32 16, 16
      %268 = vsyncadd [#allocation5], %s267
      %s270 = sshll.u32 [#allocation12], 4
      %s271 = int_to_ptr.vmem [resolvable:$true] %s270
      %273 = dma.vmem_to_hbm [thread:$0]  %s271, 16, %s7, [#allocation5]
    $region61: #{tpu_custom_call.1} parent=1 // pred_fallthru
      _
    // Predicated region
    $region62: #{tpu_custom_call.1} parent=1 // pred_check
      _
    $region63: #{tpu_custom_call.1} parent=1 // pred_check_branch
      %275 = sbr.rel (0) target = $region65
    $region64: #{tpu_custom_call.1} parent=1 // pred_region
      %276 = dma.done [#allocation5], 16
    $region65: #{tpu_custom_call.1} parent=1 // pred_fallthru
      _
    %277 = vsyncpa [#allocation4], 1
    %278 = vsyncpa [#allocation7], 1
    %279 = vsyncpa [#allocation10], 1
    %280 = vsyncpa [#allocation5], 1

</llo_original>
